<compile_context>
chip_gen: v7x
topology: tpu7x:2x2x1
jax: 0.10.0
libtpu: 0.0.40
codegen_flags: <defaults>
</compile_context>

<pallas_src>
import functools

import jax
import jax.numpy as jnp
from jax.experimental import pallas as pl
from jax.experimental.pallas import tpu as pltpu

BN_EPS = 1e-5


# ---------------------------------------------------------------------------
# Fused (folded) BN + ReLU elementwise kernel on a lane-dense 2-D view
# ---------------------------------------------------------------------------
def _bnrelu_kernel(x_ref, scale_ref, shift_ref, o_ref):
    # x_ref:     (br, bc)  activation tile (lane axis = spatial, fully dense)
    # scale_ref: (br, 1)   per-row folded BN scale, broadcast along lanes
    # shift_ref: (br, 1)   per-row folded BN shift
    # NOTE: on ragged edge tiles the padded rows/lanes hold garbage; the garbage only
    # lands in the discarded padded output region (benign on TPU, no FP traps).
    x = x_ref[...].astype(jnp.float32)
    y = jnp.maximum(x * scale_ref[...] + shift_ref[...], 0.0)
    o_ref[...] = y.astype(o_ref.dtype)


def _round_up(v, m):
    return -(-v // m) * m


def _cdiv(a, b):
    return -(-a // b)


def _choose_tiles(rows, cols, itemsize, max_block_bytes=4 * 1024 * 1024):
    """Pick (br, bc) for the (rows, cols) lane-dense view.

    - br: full extent if rows <= 64, else 64 (multiple of 8, legal block dim).
    - bc: full row if the x block fits ~4 MiB (dtype-aware), else the largest
      multiple of 128 under the budget. With in+out double-buffered this keeps
      total live VMEM <= ~4 * max_block_bytes = 16 MiB (< 32 MiB scoped limit).
    - If the row axis yields only one tile, make the column-tile count even
      (>= 2) so the v7x megacore gets both TensorCores busy and the pipeline
      has at least 2 steps. Tiles already under budget are otherwise NOT shrunk.
    """
    br = rows if rows <= 64 else 64

    if cols <= 128:
        bc = cols  # full extent is always a legal block dim
    elif br * cols * itemsize <= max_block_bytes:
        bc = cols  # full-row block: single fully-contiguous HBM DMA per step
    else:
        bc = (max_block_bytes // (itemsize * br)) // 128 * 128
        bc = max(128, min(bc, cols // 128 * 128))

    rows_tiles = _cdiv(rows, br)
    col_tiles = _cdiv(cols, bc)

    if rows_tiles == 1 and cols > 128 and col_tiles % 2 == 1:
        # Balanced split into an even number of column tiles.
        target = col_tiles + 1  # 1 -> 2, 3 -> 4, ...
        cand = _round_up(_cdiv(cols, target), 128)
        cand = max(128, min(cand, cols // 128 * 128))
        if _cdiv(cols, cand) % 2 == 0:
            bc = cand
        else:
            # Fallback: step the tile down by 128 until the count is even.
            c2 = bc
            while c2 > 128:
                c2 -= 128
                if _cdiv(cols, c2) % 2 == 0:
                    bc = c2
                    break

    return br, bc


def bnrelu3d(x_ncdhw, gamma, beta, running_mean, running_var, eps=BN_EPS,
             donate_x=False):
    """relu(BatchNorm3d(x)) in eval mode.  x: (N, C, D, H, W).

    Set donate_x=True only when the caller no longer needs x (aliases the output
    HBM buffer onto x, saving a full-size activation allocation on 16 GiB v5e).
    """
    n, c, d, h, w = x_ncdhw.shape
    rows, cols = n * c, d * h * w

    # Fold BN running stats into per-channel scale/shift (tiny, C elements), then
    # expand to one scalar per (n, c) row of the 2-D view. Row index = n*C + c,
    # so tiling scale_c over N gives the correct per-row channel mapping.
    scale_c = gamma.astype(jnp.float32) / jnp.sqrt(running_var.astype(jnp.float32) + eps)
    shift_c = beta.astype(jnp.float32) - running_mean.astype(jnp.float32) * scale_c
    scale = jnp.tile(scale_c, (n,)).reshape(rows, 1)
    shift = jnp.tile(shift_c, (n,)).reshape(rows, 1)

    # Lane-dense 2-D view: row = (n, c), lanes = flattened D*H*W.
    # Reshape of a contiguous NCDHW array is metadata-only (no HBM copy).
    x2d = x_ncdhw.reshape(rows, cols)

    br, bc = _choose_tiles(rows, cols, x_ncdhw.dtype.itemsize)
    grid = (pl.cdiv(rows, br), pl.cdiv(cols, bc))  # rows outer, cols inner (load-bearing)

    out2d = pl.pallas_call(
        _bnrelu_kernel,
        out_shape=jax.ShapeDtypeStruct((rows, cols), x_ncdhw.dtype),
        grid_spec=pltpu.PrefetchScalarGridSpec(
            num_scalar_prefetch=0,
            grid=grid,
            in_specs=[
                pl.BlockSpec((br, bc), lambda ri, ci: (ri, ci)),
                # scale/shift blocks depend only on ri -> stay VMEM-resident across
                # the inner column axis (no tiny re-DMAs every step).
                pl.BlockSpec((br, 1), lambda ri, ci: (ri, 0)),
                pl.BlockSpec((br, 1), lambda ri, ci: (ri, 0)),
            ],
            out_specs=pl.BlockSpec((br, bc), lambda ri, ci: (ri, ci)),
        ),
        compiler_params=pltpu.CompilerParams(
            dimension_semantics=("parallel", "parallel"),
            # 32 MiB scoped VMEM works on every generation (v7x has only 64 MiB
            # physical per TC); block budget above leaves ample headroom.
            vmem_limit_bytes=32 * 1024 * 1024,
        ),
        input_output_aliases=({0: 0} if donate_x else {}),
    )(x2d, scale, shift)

    return out2d.reshape(n, c, d, h, w)


# ---------------------------------------------------------------------------
# Pure-JAX reference (same eval-mode BatchNorm3d semantics as torch .eval())
# ---------------------------------------------------------------------------
def reference_bnrelu3d(x, gamma, beta, running_mean, running_var, eps=BN_EPS):
    inv = gamma / jnp.sqrt(running_var + eps)
    xn = (x - running_mean[None, :, None, None, None]) \
         * inv[None, :, None, None, None] + beta[None, :, None, None, None]
    return jnp.maximum(xn, 0.0)


# ---------------------------------------------------------------------------
if __name__ == "__main__":
    key = jax.random.PRNGKey(0)
    N, C, D, H, W = 2, 4, 8, 16, 16

    kx, kg, kb, km, kv = jax.random.split(key, 5)
    x = jax.random.normal(kx, (N, C, D, H, W), jnp.float32)
    gamma = 1.0 + 0.1 * jax.random.normal(kg, (C,), jnp.float32)
    beta = 0.1 * jax.random.normal(kb, (C,), jnp.float32)
    running_mean = 0.1 * jax.random.normal(km, (C,), jnp.float32)
    running_var = 0.5 + jnp.abs(jax.random.normal(kv, (C,), jnp.float32))

    fwd = jax.jit(functools.partial(bnrelu3d, eps=BN_EPS))
    y = jax.block_until_ready(fwd(x, gamma, beta, running_mean, running_var))

    # correctness check against the pure-JAX reference
    y_ref = reference_bnrelu3d(x, gamma, beta, running_mean, running_var, BN_EPS)
    assert y.shape == x.shape, y.shape
    max_err = float(jnp.max(jnp.abs(y - y_ref)))
    assert bool(jnp.allclose(y, y_ref, atol=1e-5, rtol=1e-5)), max_err
    # TODO(synk): training-mode BatchNorm3d (batch statistics + momentum=0.05 running-stat
    # updates) is intentionally not implemented; this kernel matches .eval() semantics.

    print("KERNEL_OK")
</pallas_src>

<mosaic_0001>
module attributes {stable_mosaic.version = 11 : i64} {
  func.func @_bnrelu_kernel(%arg0: i32, %arg1: i32, %arg2: memref<8x1024xf32, #tpu.memory_space<vmem>>, %arg3: memref<8x1xf32, #tpu.memory_space<vmem>>, %arg4: memref<8x1xf32, #tpu.memory_space<vmem>>, %arg5: memref<8x1024xf32, #tpu.memory_space<vmem>>) attributes {dimension_semantics = [#tpu.dimension_semantics<parallel>, #tpu.dimension_semantics<parallel>], iteration_bounds = array<i64: 1, 2>, scalar_prefetch = 0 : i64, scratch_operands = 0 : i64, tpu.core_type = #tpu.core_type<tc>, window_params = [{transform_indices = @transform_0, window_bounds = array<i64: 8, 1024>}, {transform_indices = @transform_1, window_bounds = array<i64: 8, 1>}, {transform_indices = @transform_2, window_bounds = array<i64: 8, 1>}, {transform_indices = @transform_3, window_bounds = array<i64: 8, 1024>}]} {
    %c0 = arith.constant 0 : index
    %c0_0 = arith.constant 0 : index
    %0 = vector.load %arg2[%c0, %c0_0] : memref<8x1024xf32, #tpu.memory_space<vmem>>, vector<8x1024xf32>
    %c0_1 = arith.constant 0 : index
    %c0_2 = arith.constant 0 : index
    %1 = vector.load %arg3[%c0_1, %c0_2] : memref<8x1xf32, #tpu.memory_space<vmem>>, vector<8x1xf32>
    %2 = vector.broadcast %1 : vector<8x1xf32> to vector<8x1024xf32>
    %3 = arith.mulf %0, %2 : vector<8x1024xf32>
    %c0_3 = arith.constant 0 : index
    %c0_4 = arith.constant 0 : index
    %4 = vector.load %arg4[%c0_3, %c0_4] : memref<8x1xf32, #tpu.memory_space<vmem>>, vector<8x1xf32>
    %5 = vector.broadcast %4 : vector<8x1xf32> to vector<8x1024xf32>
    %6 = arith.addf %3, %5 : vector<8x1024xf32>
    %cst = arith.constant 0.000000e+00 : f32
    %7 = vector.broadcast %cst : f32 to vector<8x1024xf32>
    %8 = arith.maximumf %6, %7 : vector<8x1024xf32>
    %c0_5 = arith.constant 0 : index
    %c0_6 = arith.constant 0 : index
    %9 = vector.load %arg5[%c0_5, %c0_6] : memref<8x1024xf32, #tpu.memory_space<vmem>>, vector<8x1024xf32>
    tpu.vector_store %arg5[%c0_5, %c0_6], %8 {strides = array<i32>} : memref<8x1024xf32, #tpu.memory_space<vmem>>, vector<8x1024xf32>,
    return
  }
  func.func @transform_0(%arg0: i32, %arg1: i32) -> (i32, i32) {
    %c0_i32 = arith.constant 0 : i32
    return %arg0, %arg1 : i32, i32
  }
  func.func @transform_1(%arg0: i32, %arg1: i32) -> (i32, i32) {
    %c0_i32 = arith.constant 0 : i32
    %c0_i32_0 = arith.constant 0 : i32
    return %arg0, %c0_i32 : i32, i32
  }
  func.func @transform_2(%arg0: i32, %arg1: i32) -> (i32, i32) {
    %c0_i32 = arith.constant 0 : i32
    %c0_i32_0 = arith.constant 0 : i32
    return %arg0, %c0_i32 : i32, i32
  }
  func.func @transform_3(%arg0: i32, %arg1: i32) -> (i32, i32) {
    %c0_i32 = arith.constant 0 : i32
    return %arg0, %arg1 : i32, i32
  }
}

</mosaic_0001>

<llo_original>
// kernel: tile.18
$region0: #{tile.18}
  #allocation0 [shape = 's32[1]{0}', space=sflag, size = 0x4, scoped, tag = 'scoped memory for tile.18']
  %s0 = inlined_call_operand.vmem [shape: f32[4], index: 0, kind: input, shape index: {}]
  %s1 = inlined_call_operand.vmem [shape: f32[2,4], index: 1, kind: output, shape index: {}]
  // Predicated region
  $region2: #{tile.18} parent=0 // pred_check
    _
  $region3: #{tile.18} parent=0 // pred_check_branch
    %3 = sbr.rel (0) target = $region5
  $region4: #{tile.18} parent=0 // pred_region
    _
  $region5: #{tile.18} parent=0 // pred_fallthru
    _
  %v4 = vld [vmem:[%s0] ss:$0 sm:$0xff]
  %5 = vst [vmem:[%s1] sm:$0x3] %v4

// kernel: tile.0
$region0: #{tile.0}
  %s0 = inlined_call_operand.vmem [shape: f32[2,4], index: 0, kind: input, shape index: {}]
  %s1 = inlined_call_operand.vmem [shape: f32[8,1], index: 1, kind: output, shape index: {}]
  $region1: #{tile.0} parent=0
    #allocation0 [shape = 'u8[4096]{0}', space=vmem, size = 0x1000, scoped, tag = 'scoped mem for input reshape']
    %s3 = sshllo.u32 0, 2
    %v4 = vld [vmem:[%s0] sm:%s3]
    %5 = vst [vmem:[#allocation0] sm:%s3] %v4
    %v6 = vld [vmem:[#allocation0] sm:$0x3]
    %vm7 = vcmask 7168
    %8 = vst.msk [vmem:[%s1] ss:$4 sm:$0x3] %vm7, %v6
    %v9 = vld [vmem:[#allocation0] sm:$0x3]
    %10 = vrot.lane.b32.xlu0 %v9, 127
    %v11 = vpop.permute.xlu0 %10
    %vm12 = vcmask 7168
    %s13 = scalar_lea.vmem %s1, 1
    %14 = vst.msk [vmem:[%s13] ss:$4 sm:$0x3] %vm12, %v11
    %v15 = vld [vmem:[#allocation0] sm:$0x3]
    %16 = vrot.lane.b32.xlu0 %v15, 126
    %v17 = vpop.permute.xlu0 %16
    %vm18 = vcmask 7168
    %s19 = scalar_lea.vmem %s1, 2
    %20 = vst.msk [vmem:[%s19] ss:$4 sm:$0x3] %vm18, %v17
    %v21 = vld [vmem:[#allocation0] sm:$0x3]
    %22 = vrot.lane.b32.xlu0 %v21, 125
    %v23 = vpop.permute.xlu0 %22
    %vm24 = vcmask 7168
    %s25 = scalar_lea.vmem %s1, 3
    %26 = vst.msk [vmem:[%s25] ss:$4 sm:$0x3] %vm24, %v23

// kernel: bnrelu3d.1
$region0: #{bnrelu3d.1}
  #allocation0 [shape = 'u32[]', space=smem, size = 0x4, offset = 0x4, fixed_abs, tag = 'smem constant byte address 0x4 - core index']
  #allocation1 [shape = 'u32[144,128]{1,0:T(1,128)}', space=vmem, size = 0x12000, scoped, tag = 'internal scratch']
  %s0 = inlined_call_operand.vmem [shape: f32[8,2048], index: 0, kind: input, shape index: {}]
  %s1 = inlined_call_operand.vmem [shape: f32[8,1], index: 1, kind: input, shape index: {}]
  %s2 = inlined_call_operand.vmem [shape: f32[8,1], index: 2, kind: input, shape index: {}]
  %s3 = inlined_call_operand.vmem [shape: f32[8,2048], index: 3, kind: output, shape index: {}]
  %s4 = sld [smem:[#allocation0]]
  $region45: #{bnrelu3d.1} parent=0
    _
  %s6 = ssub.s32 1, %s4
  %s7 = scalar_select 0, %s6, %s4
  loop: start=0, step=1, limit=4
  $region2: #{bnrelu3d.1} parent=0 // loop_pre_header
    _
  $region3: #{bnrelu3d.1} parent=0 // loop_header
    %s9 = sphi 0, %s13
    %p10 = scmp.ge.s32.totalorder %s9, 4
    %s16 = sphi 0, %s28
    %s17 = sphi 0, %s24
    %s18 = sphi 0, %s16
    %s19 = sphi 0, %s17
    %s20 = sphi 0, %s18
    %s21 = sphi 0, %s19
    %s33 = sphi 0, %s35
    %s36 = sphi 0, %s33
    %s37 = sphi 0, %s36
    %s53 = sphi 0, %s37
    %s59 = sphi 0, %s61
    %s62 = sphi 0, %s59
    %s63 = sphi 0, %s62
    %s79 = sphi 0, %s63
    %s85 = sphi 0, %s87
    %s88 = sphi 0, %s85
    %s89 = sphi 0, %s88
    %s105 = sphi 0, %s89
    %s113 = sphi 0, %s115
    %s116 = sphi 0, %s113
    %s117 = sphi 0, %s116
    %s133 = sphi 0, %s117
  $region4: #{bnrelu3d.1} parent=0 // loop_header_branch
    %12 = sbr.rel (%p10) target = $region8
  $region5: #{bnrelu3d.1} parent=0 // loop_body
    %s14 = ssub.s32 %s9, 1
    %s15 = ssub.s32 %s9, 2
    %s22 = sadd.s32 1, %s17
    %p23 = scmp.ge.s32.totalorder %s22, 2
    %s24 = scalar_select %p23, 0, %s22
    %s25 = sadd.s32 1, %s16
    %s26 = scalar_select %p23, %s25, %s16
    %p27 = scmp.ge.s32.totalorder %s26, 1
    %s28 = scalar_select %p27, 0, %s26
    %s29 = ssub.s32 %s16, %s28
    %s30 = ssub.s32 %s17, %s24
    %s31 = sor.u32 %s29, %s30
    %p32 = scmp.eq.s32.totalorder %s31, 0
    %s34 = sadd.s32 %s33, 1
    %s35 = scalar_select %p32, %s33, %s34
    %p38 = pneg %p32
    %p39 = scmp.eq.s32.totalorder %s9, 1
    %p40 = por %p38, %p39
    %p41 = scmp.ne.s32.totalorder %s33, %s36
    %p42 = scmp.eq.s32.totalorder %s9, 0
    %p43 = por %p41, %p42
    %p44 = scmp.ne.s32.totalorder %s33, %s36
    %p45 = scmp.eq.s32.totalorder %s14, 1
    %p46 = por %p44, %p45
    %p47 = scmp.ne.s32.totalorder %s36, %s37
    %p48 = scmp.eq.s32.totalorder %s14, 0
    %p49 = por %p47, %p48
    %p50 = scmp.ne.s32.totalorder %s36, %s37
    %p51 = scmp.eq.s32.totalorder %s15, 1
    %p52 = por %p50, %p51
    %p54 = scmp.ne.s32.totalorder %s37, %s53
    %p55 = scmp.eq.s32.totalorder %s15, 0
    %p56 = por %p54, %p55
    %s57 = ssub.s32 %s16, %s28
    %p58 = scmp.eq.s32.totalorder %s57, 0
    %s60 = sadd.s32 %s59, 1
    %s61 = scalar_select %p58, %s59, %s60
    %p64 = pneg %p58
    %p65 = scmp.eq.s32.totalorder %s9, 1
    %p66 = por %p64, %p65
    %p67 = scmp.ne.s32.totalorder %s59, %s62
    %p68 = scmp.eq.s32.totalorder %s9, 0
    %p69 = por %p67, %p68
    %p70 = scmp.ne.s32.totalorder %s59, %s62
    %p71 = scmp.eq.s32.totalorder %s14, 1
    %p72 = por %p70, %p71
    %p73 = scmp.ne.s32.totalorder %s62, %s63
    %p74 = scmp.eq.s32.totalorder %s14, 0
    %p75 = por %p73, %p74
    %p76 = scmp.ne.s32.totalorder %s62, %s63
    %p77 = scmp.eq.s32.totalorder %s15, 1
    %p78 = por %p76, %p77
    %p80 = scmp.ne.s32.totalorder %s63, %s79
    %p81 = scmp.eq.s32.totalorder %s15, 0
    %p82 = por %p80, %p81
    %s83 = ssub.s32 %s16, %s28
    %p84 = scmp.eq.s32.totalorder %s83, 0
    %s86 = sadd.s32 %s85, 1
    %s87 = scalar_select %p84, %s85, %s86
    %p90 = pneg %p84
    %p91 = scmp.eq.s32.totalorder %s9, 1
    %p92 = por %p90, %p91
    %p93 = scmp.ne.s32.totalorder %s85, %s88
    %p94 = scmp.eq.s32.totalorder %s9, 0
    %p95 = por %p93, %p94
    %p96 = scmp.ne.s32.totalorder %s85, %s88
    %p97 = scmp.eq.s32.totalorder %s14, 1
    %p98 = por %p96, %p97
    %p99 = scmp.ne.s32.totalorder %s88, %s89
    %p100 = scmp.eq.s32.totalorder %s14, 0
    %p101 = por %p99, %p100
    %p102 = scmp.ne.s32.totalorder %s88, %s89
    %p103 = scmp.eq.s32.totalorder %s15, 1
    %p104 = por %p102, %p103
    %p106 = scmp.ne.s32.totalorder %s89, %s105
    %p107 = scmp.eq.s32.totalorder %s15, 0
    %p108 = por %p106, %p107
    %s109 = ssub.s32 %s16, %s28
    %s110 = ssub.s32 %s17, %s24
    %s111 = sor.u32 %s109, %s110
    %p112 = scmp.eq.s32.totalorder %s111, 0
    %s114 = sadd.s32 %s113, 1
    %s115 = scalar_select %p112, %s113, %s114
    %p118 = pneg %p112
    %p119 = scmp.eq.s32.totalorder %s9, 1
    %p120 = por %p118, %p119
    %p121 = scmp.ne.s32.totalorder %s113, %s116
    %p122 = scmp.eq.s32.totalorder %s9, 0
    %p123 = por %p121, %p122
    %p124 = scmp.ne.s32.totalorder %s113, %s116
    %p125 = scmp.eq.s32.totalorder %s14, 1
    %p126 = por %p124, %p125
    %p127 = scmp.ne.s32.totalorder %s116, %s117
    %p128 = scmp.eq.s32.totalorder %s14, 0
    %p129 = por %p127, %p128
    %p130 = scmp.ne.s32.totalorder %s116, %s117
    %p131 = scmp.eq.s32.totalorder %s15, 1
    %p132 = por %p130, %p131
    %p134 = scmp.ne.s32.totalorder %s117, %s133
    %p135 = scmp.eq.s32.totalorder %s15, 0
    %p136 = por %p134, %p135
    %p137 = scmp.le.s32.totalorder 1, %s9
    %p138 = scmp.lt.s32.totalorder %s9, 3
    %p139 = pnand %p137, %p138
    %p140 = pneg %p139
    // Predicated region
    $region9: #{bnrelu3d.1} parent=5 // pred_check
      _
    $region10: #{bnrelu3d.1} parent=5 // pred_check_branch
      %142 = sbr.rel (%p139) target = $region12
    $region11: #{bnrelu3d.1} parent=5 // pred_region
      %s143 = ssub.s32 %s9, 1
      // Predicated region
      $region13: #{bnrelu3d.1} parent=11 // pred_check
        %p144 = pneg %p75
      $region14: #{bnrelu3d.1} parent=11 // pred_check_branch
        %146 = sbr.rel (%p144) target = $region16
      $region15: #{bnrelu3d.1} parent=11 // pred_region
        %p147 = scmp.lt.s32.totalorder %s18, 0
        %s148 = scalar_select %p147, %s18, 0
        %s149 = smul.addr %s148, 8
        %s150 = scalar_lea.vmem %s1, %s149
      $region16: #{bnrelu3d.1} parent=11 // pred_fallthru
        _
      // Predicated region
      $region17: #{bnrelu3d.1} parent=11 // pred_check
        %p151 = pneg %p101
      $region18: #{bnrelu3d.1} parent=11 // pred_check_branch
        %153 = sbr.rel (%p151) target = $region20
      $region19: #{bnrelu3d.1} parent=11 // pred_region
        %p154 = scmp.lt.s32.totalorder %s18, 0
        %s155 = scalar_select %p154, %s18, 0
        %s156 = smul.addr %s155, 8
        %s157 = scalar_lea.vmem %s2, %s156
      $region20: #{bnrelu3d.1} parent=11 // pred_fallthru
        _
    $region12: #{bnrelu3d.1} parent=5 // pred_fallthru
      _
    %p158 = scmp.lt.s32.totalorder %s9, 2
    // Predicated region
    $region21: #{bnrelu3d.1} parent=5 // pred_check
      %p159 = pneg %p158
    $region22: #{bnrelu3d.1} parent=5 // pred_check_branch
      %161 = sbr.rel (%p159) target = $region24
    $region23: #{bnrelu3d.1} parent=5 // pred_region
      // Predicated region
      $region25: #{bnrelu3d.1} parent=23 // pred_check
        %p162 = pneg %p43
      $region26: #{bnrelu3d.1} parent=23 // pred_check_branch
        %164 = sbr.rel (%p162) target = $region28
      $region27: #{bnrelu3d.1} parent=23 // pred_region
        %s165 = smul.u32 8, %s17
        %p166 = scmp.lt.s32.totalorder %s16, 0
        %s167 = scalar_select %p166, %s16, 0
        %p168 = scmp.lt.s32.totalorder %s165, 15
        %s169 = scalar_select %p168, %s165, 15
        %s170 = smul.addr %s167, 16
        %s171 = sadd.s32 %s169, %s170
        %s172 = smul.addr %s171, 8
        %s173 = scalar_lea.vmem %s0, %s172
        %s174 = smul.u32 8, %s17
      $region28: #{bnrelu3d.1} parent=23 // pred_fallthru
        _
    $region24: #{bnrelu3d.1} parent=5 // pred_fallthru
      _
    %p175 = scmp.le.s32.totalorder 1, %s9
    %p176 = scmp.lt.s32.totalorder %s9, 3
    %p177 = pnand %p175, %p176
    %p178 = pneg %p177
    // Predicated region
    $region29: #{bnrelu3d.1} parent=5 // pred_check
      _
    $region30: #{bnrelu3d.1} parent=5 // pred_check_branch
      %180 = sbr.rel (%p177) target = $region32
    $region31: #{bnrelu3d.1} parent=5 // pred_region
      %s181 = ssub.s32 %s9, 1
      %s182 = smul.u32 8, %s19
      %p183 = scmp.lt.s32.totalorder %s18, 0
      %s184 = scalar_select %p183, %s18, 0
      %p185 = scmp.lt.s32.totalorder %s182, 15
      %s186 = scalar_select %p185, %s182, 15
      %s187 = smul.addr %s184, 16
      %s188 = sadd.s32 %s186, %s187
      %s189 = smul.addr %s188, 8
      %s190 = scalar_lea.vmem %s0, %s189
      %p191 = pneg %p49
      %p192 = pneg %p46
      %p193 = scmp.lt.s32.totalorder %s18, 0
      %s194 = scalar_select %p193, %s18, 0
      %s195 = smul.addr %s194, 8
      %s196 = scalar_lea.vmem %s1, %s195
      %p197 = pneg %p75
      %p198 = pneg %p72
      %p199 = scmp.lt.s32.totalorder %s18, 0
      %s200 = scalar_select %p199, %s18, 0
      %s201 = smul.addr %s200, 8
      %s202 = scalar_lea.vmem %s2, %s201
      %p203 = pneg %p101
      %p204 = pneg %p98
      %p205 = pneg %p129
      %p206 = pneg %p126
      %s207 = smul.u32 8, %s19
      %p208 = scmp.lt.s32.totalorder %s18, 0
      %s209 = scalar_select %p208, %s18, 0
      %p210 = scmp.lt.s32.totalorder %s207, 15
      %s211 = scalar_select %p210, %s207, 15
      %s212 = smul.addr %s209, 16
      %s213 = sadd.s32 %s211, %s212
      %s214 = smul.addr %s213, 8
      %s215 = scalar_lea.vmem %s3, %s214
      %s216 = smul.u32 8, %s19
      %p217 = scmp.lt.s32.totalorder %s18, 0
      %s218 = scalar_select %p217, %s18, 0
      %p219 = scmp.lt.s32.totalorder %s216, 15
      %s220 = scalar_select %p219, %s216, 15
      %s221 = smul.addr %s218, 16
      %s222 = sadd.s32 %s220, %s221
      %s223 = smul.addr %s222, 8
      %s224 = scalar_lea.vmem %s0, %s223
      %s225 = smul.u32 8, %s19
      %p226 = scmp.lt.s32.totalorder %s18, 0
      %s227 = scalar_select %p226, %s18, 0
      %s228 = smul.addr %s227, 8
      %s229 = scalar_lea.vmem %s1, %s228
      %p230 = scmp.lt.s32.totalorder %s18, 0
      %s231 = scalar_select %p230, %s18, 0
      %s232 = smul.addr %s231, 8
      %s233 = scalar_lea.vmem %s2, %s232
      %s234 = smul.u32 8, %s19
      %p235 = scmp.lt.s32.totalorder %s18, 0
      %s236 = scalar_select %p235, %s18, 0
      %p237 = scmp.lt.s32.totalorder %s234, 15
      %s238 = scalar_select %p237, %s234, 15
      %s239 = smul.addr %s236, 16
      %s240 = sadd.s32 %s238, %s239
      %s241 = smul.addr %s240, 8
      %s242 = scalar_lea.vmem %s3, %s241
      %s243 = smul.u32 8, %s19
      %v244 = vld [vmem:[%s224] sm:$0xff]
      %v245 = vld [vmem:[%s224 + $0x8] sm:$0xff]
      %v246 = vld [vmem:[%s224 + $0x10] sm:$0xff]
      %v247 = vld [vmem:[%s224 + $0x18] sm:$0xff]
      %v248 = vld [vmem:[%s224 + $0x20] sm:$0xff]
      %v249 = vld [vmem:[%s224 + $0x28] sm:$0xff]
      %v250 = vld [vmem:[%s224 + $0x30] sm:$0xff]
      %v251 = vld [vmem:[%s224 + $0x38] sm:$0xff]
      %v252 = vld [vmem:[%s229] sm:$0xff]
      %254 = vset.pattern.permute.xlu0 0
      %255 = vperm.xlu0 %254, %v252
      %v256 = vpop.permute.xlu0 %255
      %v258 = vmul.f32 %v244, %v256
      %v259 = vmul.f32 %v245, %v256
      %v260 = vmul.f32 %v246, %v256
      %v261 = vmul.f32 %v247, %v256
      %v262 = vmul.f32 %v248, %v256
      %v263 = vmul.f32 %v249, %v256
      %v264 = vmul.f32 %v250, %v256
      %v265 = vmul.f32 %v251, %v256
      %v266 = vld [vmem:[%s233] sm:$0xff]
      %268 = vset.pattern.permute.xlu0 0
      %269 = vperm.xlu0 %268, %v266
      %v270 = vpop.permute.xlu0 %269
      %v272 = vadd.f32 %v258, %v270
      %v273 = vadd.f32 %v259, %v270
      %v274 = vadd.f32 %v260, %v270
      %v275 = vadd.f32 %v261, %v270
      %v276 = vadd.f32 %v262, %v270
      %v277 = vadd.f32 %v263, %v270
      %v278 = vadd.f32 %v264, %v270
      %v279 = vadd.f32 %v265, %v270
      %v280 = vmax.f32 %v272, 0.0
      %v281 = vmax.f32 %v273, 0.0
      %v282 = vmax.f32 %v274, 0.0
      %v283 = vmax.f32 %v275, 0.0
      %v284 = vmax.f32 %v276, 0.0
      %v285 = vmax.f32 %v277, 0.0
      %v286 = vmax.f32 %v278, 0.0
      %v287 = vmax.f32 %v279, 0.0
      %288 = vst [vmem:[%s242] sm:$0xff] %v280
      %289 = vst [vmem:[%s242 + $0x8] sm:$0xff] %v281
      %290 = vst [vmem:[%s242 + $0x10] sm:$0xff] %v282
      %291 = vst [vmem:[%s242 + $0x18] sm:$0xff] %v283
      %292 = vst [vmem:[%s242 + $0x20] sm:$0xff] %v284
      %293 = vst [vmem:[%s242 + $0x28] sm:$0xff] %v285
      %294 = vst [vmem:[%s242 + $0x30] sm:$0xff] %v286
      %295 = vst [vmem:[%s242 + $0x38] sm:$0xff] %v287
      %s296 = smul.u32 8, %s19
      %p297 = scmp.lt.s32.totalorder %s18, 0
      %s298 = scalar_select %p297, %s18, 0
      %p299 = scmp.lt.s32.totalorder %s296, 15
      %s300 = scalar_select %p299, %s296, 15
      %s301 = smul.addr %s298, 16
      %s302 = sadd.s32 %s300, %s301
      %s303 = smul.addr %s302, 8
      %s304 = scalar_lea.vmem %s3, %s303
      // Predicated region
      $region33: #{bnrelu3d.1} parent=31 // pred_check
        %p305 = pneg %p126
      $region34: #{bnrelu3d.1} parent=31 // pred_check_branch
        %307 = sbr.rel (%p305) target = $region36
      $region35: #{bnrelu3d.1} parent=31 // pred_region
        %s308 = smul.u32 8, %s19
      $region36: #{bnrelu3d.1} parent=31 // pred_fallthru
        _
    $region32: #{bnrelu3d.1} parent=5 // pred_fallthru
      _
    %p309 = scmp.le.s32.totalorder 2, %s9
    // Predicated region
    $region37: #{bnrelu3d.1} parent=5 // pred_check
      %p310 = pneg %p309
    $region38: #{bnrelu3d.1} parent=5 // pred_check_branch
      %312 = sbr.rel (%p310) target = $region40
    $region39: #{bnrelu3d.1} parent=5 // pred_region
      %s313 = ssub.s32 %s9, 2
      // Predicated region
      $region41: #{bnrelu3d.1} parent=39 // pred_check
        %p314 = pneg %p132
      $region42: #{bnrelu3d.1} parent=39 // pred_check_branch
        %316 = sbr.rel (%p314) target = $region44
      $region43: #{bnrelu3d.1} parent=39 // pred_region
        %s317 = smul.u32 8, %s21
        %p318 = scmp.lt.s32.totalorder %s20, 0
        %s319 = scalar_select %p318, %s20, 0
        %p320 = scmp.lt.s32.totalorder %s317, 15
        %s321 = scalar_select %p320, %s317, 15
        %s322 = smul.addr %s319, 16
        %s323 = sadd.s32 %s321, %s322
        %s324 = smul.addr %s323, 8
        %s325 = scalar_lea.vmem %s3, %s324
      $region44: #{bnrelu3d.1} parent=39 // pred_fallthru
        _
    $region40: #{bnrelu3d.1} parent=5 // pred_fallthru
      _
  $region6: #{bnrelu3d.1} parent=0 // loop_footer
    %s13 = sadd.s32 1, %s9
  $region7: #{bnrelu3d.1} parent=0 // loop_footer_branch
    %8 = sbr.rel target = $region3
  $region8: #{bnrelu3d.1} parent=0 // loop_exit
    _

</llo_original>
